<compile_context>
chip_gen: v7x
topology: tpu7x:2x2x1
jax: 0.10.0
libtpu: 0.0.40
codegen_flags: <defaults>
</compile_context>

<pallas_src>
import math

import numpy as np

import jax
import jax.numpy as jnp
from jax.experimental import pallas as pl
from jax.experimental.pallas import tpu as pltpu


def build_pe_table(d_model: int, max_len: int = 5000) -> jnp.ndarray:
    """Deterministic sinusoidal positional-encoding table, shape (max_len, d_model)."""
    position = jnp.arange(max_len, dtype=jnp.float32)[:, None]                      # (max_len, 1)
    div_term = jnp.exp(jnp.arange(0, d_model, 2, dtype=jnp.float32)
                       * (-math.log(10000.0) / d_model))                            # (d_model//2,)
    pe = jnp.zeros((max_len, d_model), dtype=jnp.float32)
    pe = pe.at[:, 0::2].set(jnp.sin(position * div_term))
    pe = pe.at[:, 1::2].set(jnp.cos(position * div_term))
    return pe


def _choose_row_tile(rows: int, lanes: int, itemsize: int,
                     target_bytes: int = 1 << 20) -> int:
    """Largest row tile (multiple of 8) whose buffer is ~<= target_bytes, clamped to rows."""
    tr = (target_bytes // max(1, lanes * itemsize)) // 8 * 8
    tr = max(8, int(tr))
    return int(min(rows, tr))


def positional_encoding_forward(x: jnp.ndarray,
                                pe_table: jnp.ndarray,
                                *,
                                p: float = 0.1,
                                training: bool = True,
                                rng_key=None) -> jnp.ndarray:
    """x: [bs, seq_len, d_model] -> [bs, seq_len, d_model] = dropout(x + pe[:seq_len])."""
    bs, seq_len, d_model = x.shape
    pe = pe_table[:seq_len].astype(x.dtype)                    # (seq_len, d_model)

    # ---- lane-dense re-chunking of the trailing axes ----------------------------
    flat = seq_len * d_model
    if flat % 128 == 0:
        lanes = 512 if flat % 512 == 0 else 128
        rows = flat // lanes
        xk = x.reshape(bs, rows, lanes)
        pek = pe.reshape(rows, lanes)
    else:
        rows, lanes = seq_len, d_model                         # fallback: block covers full d_model
        xk, pek = x, pe

    itemsize = jnp.dtype(x.dtype).itemsize
    tr = _choose_row_tile(rows, lanes, itemsize)
    grid = (bs, pl.cdiv(rows, tr))

    # Batch dim squeezed out of the kernel view (block dim = None).
    x_spec = pl.BlockSpec((None, tr, lanes), lambda b, r: (b, r, 0))
    pe_spec = pl.BlockSpec((tr, lanes), lambda b, r: (r, 0))
    o_spec = pl.BlockSpec((None, tr, lanes), lambda b, r: (b, r, 0))

    use_dropout = training and p > 0.0

    if use_dropout:
        if rng_key is None:
            rng_key = jax.random.PRNGKey(0)
        # Per-element uniform uint32 bits; independent per (batch, row, lane).
        bits = jax.random.bits(rng_key, xk.shape, dtype=jnp.uint32)
        # Integer-domain threshold: keep iff bits >= p * 2^32  (P[keep] = 1 - p).
        thresh = np.uint32(min(int(round(p * (1 << 32))), (1 << 32) - 1))
        scale = 1.0 / (1.0 - p)                                 # weak-typed, keeps x dtype

        def kernel(x_ref, pe_ref, bits_ref, o_ref):
            y = x_ref[...] + pe_ref[...]                        # (tr, lanes), lane-aligned VPU add
            keep = bits_ref[...] >= thresh                      # uint32 compare, no float convert
            o_ref[...] = jnp.where(keep, y * scale, jnp.zeros_like(y))

        in_specs = [x_spec, pe_spec,
                    pl.BlockSpec((None, tr, lanes), lambda b, r: (b, r, 0))]
        args = (xk, pek, bits)
    else:
        def kernel(x_ref, pe_ref, o_ref):
            o_ref[...] = x_ref[...] + pe_ref[...]

        in_specs = [x_spec, pe_spec]
        args = (xk, pek)

    out = pl.pallas_call(
        kernel,
        out_shape=jax.ShapeDtypeStruct(xk.shape, x.dtype),
        grid_spec=pltpu.PrefetchScalarGridSpec(
            num_scalar_prefetch=0,
            grid=grid,
            in_specs=in_specs,
            out_specs=o_spec,
        ),
        compiler_params=pltpu.CompilerParams(
            dimension_semantics=("parallel", "parallel")),
    )(*args)

    return out.reshape(bs, seq_len, d_model)


if __name__ == "__main__":
    bs, seq_len, d_model = 2, 8, 32
    p = 0.1

    key = jax.random.PRNGKey(0)
    kx, kdrop = jax.random.split(key)
    x = jax.random.normal(kx, (bs, seq_len, d_model), dtype=jnp.float32)

    pe_table = build_pe_table(d_model, max_len=5000)

    # Training-mode forward (add PE + dropout).
    y_train = positional_encoding_forward(x, pe_table, p=p, training=True, rng_key=kdrop)
    jax.block_until_ready(y_train)

    # Eval-mode forward (dropout is identity) -- verify against plain-JAX reference.
    y_eval = positional_encoding_forward(x, pe_table, p=p, training=False)
    jax.block_until_ready(y_eval)

    ref = x + pe_table[:seq_len][None, :, :]
    assert jnp.allclose(y_eval, ref, atol=1e-6), "eval-mode mismatch vs reference"

    # Every training-mode element is either dropped (0) or rescaled by 1/(1-p).
    scale = 1.0 / (1.0 - p)
    ok = (jnp.isclose(y_train, 0.0, atol=1e-6)
          | jnp.isclose(y_train, ref * scale, atol=1e-5, rtol=1e-5))
    assert bool(jnp.all(ok)), "training-mode dropout semantics mismatch"
    assert y_train.shape == x.shape and y_train.dtype == x.dtype

    print("KERNEL_OK")
</pallas_src>

<mosaic_0001>
module attributes {stable_mosaic.version = 11 : i64} {
  func.func @kernel(%arg0: i32, %arg1: i32, %arg2: memref<1x2x128xf32, #tpu.memory_space<vmem>>, %arg3: memref<2x128xf32, #tpu.memory_space<vmem>>, %arg4: memref<1x2x128xi32, #tpu.memory_space<vmem>>, %arg5: memref<1x2x128xf32, #tpu.memory_space<vmem>>) attributes {dimension_semantics = [#tpu.dimension_semantics<parallel>, #tpu.dimension_semantics<parallel>], iteration_bounds = array<i64: 2, 1>, scalar_prefetch = 0 : i64, scratch_operands = 0 : i64, tpu.core_type = #tpu.core_type<tc>, window_params = [{transform_indices = @transform_0, window_bounds = array<i64: 1, 2, 128>}, {transform_indices = @transform_1, window_bounds = array<i64: 2, 128>}, {transform_indices = @transform_2, window_bounds = array<i64: 1, 2, 128>}, {transform_indices = @transform_3, window_bounds = array<i64: 1, 2, 128>}]} {
    %c0 = arith.constant 0 : index
    %c0_0 = arith.constant 0 : index
    %c0_1 = arith.constant 0 : index
    %0 = vector.load %arg2[%c0, %c0_0, %c0_1] : memref<1x2x128xf32, #tpu.memory_space<vmem>>, vector<1x2x128xf32>
    %1 = vector.shape_cast %0 : vector<1x2x128xf32> to vector<2x128xf32>
    %c0_2 = arith.constant 0 : index
    %c0_3 = arith.constant 0 : index
    %2 = vector.load %arg3[%c0_2, %c0_3] : memref<2x128xf32, #tpu.memory_space<vmem>>, vector<2x128xf32>
    %3 = arith.addf %1, %2 : vector<2x128xf32>
    %c0_4 = arith.constant 0 : index
    %c0_5 = arith.constant 0 : index
    %c0_6 = arith.constant 0 : index
    %4 = vector.load %arg4[%c0_4, %c0_5, %c0_6] : memref<1x2x128xi32, #tpu.memory_space<vmem>>, vector<1x2x128xi32>
    %5 = vector.shape_cast %4 : vector<1x2x128xi32> to vector<2x128xi32>
    %c429496730_i32 = arith.constant 429496730 : i32
    %6 = vector.broadcast %c429496730_i32 : i32 to vector<2x128xi32>
    %7 = arith.cmpi uge, %5, %6 : vector<2x128xi32>
    %cst = arith.constant 1.11111116 : f32
    %8 = vector.broadcast %cst : f32 to vector<2x128xf32>
    %9 = arith.mulf %3, %8 : vector<2x128xf32>
    %cst_7 = arith.constant 0.000000e+00 : f32
    %10 = vector.broadcast %cst_7 : f32 to vector<2x128xf32>
    %11 = arith.select %7, %9, %10 : vector<2x128xi1>, vector<2x128xf32>
    %c0_8 = arith.constant 0 : index
    %c0_9 = arith.constant 0 : index
    %c0_10 = arith.constant 0 : index
    %12 = vector.load %arg5[%c0_8, %c0_9, %c0_10] : memref<1x2x128xf32, #tpu.memory_space<vmem>>, vector<1x2x128xf32>
    %13 = vector.shape_cast %12 : vector<1x2x128xf32> to vector<2x128xf32>
    %14 = vector.shape_cast %11 : vector<2x128xf32> to vector<1x2x128xf32>
    tpu.vector_store %arg5[%c0_8, %c0_9, %c0_10], %14 {strides = array<i32>} : memref<1x2x128xf32, #tpu.memory_space<vmem>>, vector<1x2x128xf32>,
    return
  }
  func.func @transform_0(%arg0: i32, %arg1: i32) -> (i32, i32, i32) {
    %c0_i32 = arith.constant 0 : i32
    %c0_i32_0 = arith.constant 0 : i32
    return %arg0, %arg1, %c0_i32 : i32, i32, i32
  }
  func.func @transform_1(%arg0: i32, %arg1: i32) -> (i32, i32) {
    %c0_i32 = arith.constant 0 : i32
    %c0_i32_0 = arith.constant 0 : i32
    return %arg1, %c0_i32 : i32, i32
  }
  func.func @transform_2(%arg0: i32, %arg1: i32) -> (i32, i32, i32) {
    %c0_i32 = arith.constant 0 : i32
    %c0_i32_0 = arith.constant 0 : i32
    return %arg0, %arg1, %c0_i32 : i32, i32, i32
  }
  func.func @transform_3(%arg0: i32, %arg1: i32) -> (i32, i32, i32) {
    %c0_i32 = arith.constant 0 : i32
    %c0_i32_0 = arith.constant 0 : i32
    return %arg0, %arg1, %c0_i32 : i32, i32, i32
  }
}

</mosaic_0001>

<llo_original>
// kernel: tpu_custom_call.1
$region0: #{tpu_custom_call.1}
  #allocation0 [shape = 'u32[]', space=smem, size = 0x4, offset = 0x4, fixed_abs, tag = 'smem constant byte address 0x4 - core index']
  #allocation1 [shape = 'u32[144,128]{1,0:T(1,128)}', space=vmem, size = 0x12000, scoped, tag = 'internal scratch']
  %s0 = inlined_call_operand.hbm [shape: f32[2,2,128], index: 0, kind: input, shape index: {}]
  %s1 = inlined_call_operand.vmem [shape: f32[2,128], index: 1, kind: input, shape index: {}]
  %s2 = inlined_call_operand.vmem [shape: u32[2,2,128], index: 2, kind: input, shape index: {}]
  %s3 = inlined_call_operand.hbm [shape: f32[2,2,128], index: 3, kind: output, shape index: {}]
  %s4 = sld [smem:[#allocation0]]
  $region49: #{tpu_custom_call.1} parent=0
    _
  %s6 = ssub.s32 1, %s4
  %s7 = scalar_select 0, %s6, %s4
  $region1: #{tpu_custom_call.1} parent=0
    #allocation2 [shape = 'u8[2048]{0}', space=vmem, size = 0x800, scoped, tag = 'input window, operand 0']
    #allocation3 [shape = 's32[2]{0}', space=sflag, size = 0x8, scoped, tag = 'scoped memory for tpu_custom_call.1']
    #allocation4 [shape = 's32[2]{0}', space=sflag, size = 0x8, scoped, tag = 'scoped memory for tpu_custom_call.1']
    #allocation5 [shape = 'u8[2048]{0}', space=vmem, size = 0x800, scoped, tag = 'output window, operand 0']
    %8 = vsyncpa [#allocation3], 0
    %s9 = scalar_lea.sflag [#allocation3], 1
    %10 = vsyncpa %s9, 0
    %11 = vsyncpa [#allocation4], 0
    %s12 = scalar_lea.sflag [#allocation4], 1
    %13 = vsyncpa %s12, 0
    loop: start=0, step=1, limit=4
    $region2: #{tpu_custom_call.1} parent=1 // loop_pre_header
      _
    $region3: #{tpu_custom_call.1} parent=1 // loop_header
      %s15 = sphi 0, %s19
      %p16 = scmp.ge.s32.totalorder %s15, 4
      %s22 = sphi 0, %s34
      %s23 = sphi 0, %s30
      %s24 = sphi 0, %s22
      %s25 = sphi 0, %s23
      %s26 = sphi 0, %s24
      %s27 = sphi 0, %s25
      %s39 = sphi 0, %s41
      %s42 = sphi 0, %s39
      %s43 = sphi 0, %s42
      %s59 = sphi 0, %s43
      %s65 = sphi 0, %s67
      %s68 = sphi 0, %s65
      %s69 = sphi 0, %s68
      %s85 = sphi 0, %s69
      %s93 = sphi 0, %s95
      %s96 = sphi 0, %s93
      %s97 = sphi 0, %s96
      %s113 = sphi 0, %s97
      %s121 = sphi 0, %s123
      %s124 = sphi 0, %s121
      %s125 = sphi 0, %s124
      %s141 = sphi 0, %s125
    $region4: #{tpu_custom_call.1} parent=1 // loop_header_branch
      %18 = sbr.rel (%p16) target = $region8
    $region5: #{tpu_custom_call.1} parent=1 // loop_body
      %s20 = ssub.s32 %s15, 1
      %s21 = ssub.s32 %s15, 2
      %s28 = sadd.s32 1, %s23
      %p29 = scmp.ge.s32.totalorder %s28, 1
      %s30 = scalar_select %p29, 0, %s28
      %s31 = sadd.s32 1, %s22
      %s32 = scalar_select %p29, %s31, %s22
      %p33 = scmp.ge.s32.totalorder %s32, 2
      %s34 = scalar_select %p33, 0, %s32
      %s35 = ssub.s32 %s22, %s34
      %s36 = ssub.s32 %s23, %s30
      %s37 = sor.u32 %s35, %s36
      %p38 = scmp.eq.s32.totalorder %s37, 0
      %s40 = sadd.s32 %s39, 1
      %s41 = scalar_select %p38, %s39, %s40
      %p44 = pneg %p38
      %p45 = scmp.eq.s32.totalorder %s15, 1
      %p46 = por %p44, %p45
      %p47 = scmp.ne.s32.totalorder %s39, %s42
      %p48 = scmp.eq.s32.totalorder %s15, 0
      %p49 = por %p47, %p48
      %p50 = scmp.ne.s32.totalorder %s39, %s42
      %p51 = scmp.eq.s32.totalorder %s20, 1
      %p52 = por %p50, %p51
      %p53 = scmp.ne.s32.totalorder %s42, %s43
      %p54 = scmp.eq.s32.totalorder %s20, 0
      %p55 = por %p53, %p54
      %p56 = scmp.ne.s32.totalorder %s42, %s43
      %p57 = scmp.eq.s32.totalorder %s21, 1
      %p58 = por %p56, %p57
      %p60 = scmp.ne.s32.totalorder %s43, %s59
      %p61 = scmp.eq.s32.totalorder %s21, 0
      %p62 = por %p60, %p61
      %s63 = ssub.s32 %s23, %s30
      %p64 = scmp.eq.s32.totalorder %s63, 0
      %s66 = sadd.s32 %s65, 1
      %s67 = scalar_select %p64, %s65, %s66
      %p70 = pneg %p64
      %p71 = scmp.eq.s32.totalorder %s15, 1
      %p72 = por %p70, %p71
      %p73 = scmp.ne.s32.totalorder %s65, %s68
      %p74 = scmp.eq.s32.totalorder %s15, 0
      %p75 = por %p73, %p74
      %p76 = scmp.ne.s32.totalorder %s65, %s68
      %p77 = scmp.eq.s32.totalorder %s20, 1
      %p78 = por %p76, %p77
      %p79 = scmp.ne.s32.totalorder %s68, %s69
      %p80 = scmp.eq.s32.totalorder %s20, 0
      %p81 = por %p79, %p80
      %p82 = scmp.ne.s32.totalorder %s68, %s69
      %p83 = scmp.eq.s32.totalorder %s21, 1
      %p84 = por %p82, %p83
      %p86 = scmp.ne.s32.totalorder %s69, %s85
      %p87 = scmp.eq.s32.totalorder %s21, 0
      %p88 = por %p86, %p87
      %s89 = ssub.s32 %s22, %s34
      %s90 = ssub.s32 %s23, %s30
      %s91 = sor.u32 %s89, %s90
      %p92 = scmp.eq.s32.totalorder %s91, 0
      %s94 = sadd.s32 %s93, 1
      %s95 = scalar_select %p92, %s93, %s94
      %p98 = pneg %p92
      %p99 = scmp.eq.s32.totalorder %s15, 1
      %p100 = por %p98, %p99
      %p101 = scmp.ne.s32.totalorder %s93, %s96
      %p102 = scmp.eq.s32.totalorder %s15, 0
      %p103 = por %p101, %p102
      %p104 = scmp.ne.s32.totalorder %s93, %s96
      %p105 = scmp.eq.s32.totalorder %s20, 1
      %p106 = por %p104, %p105
      %p107 = scmp.ne.s32.totalorder %s96, %s97
      %p108 = scmp.eq.s32.totalorder %s20, 0
      %p109 = por %p107, %p108
      %p110 = scmp.ne.s32.totalorder %s96, %s97
      %p111 = scmp.eq.s32.totalorder %s21, 1
      %p112 = por %p110, %p111
      %p114 = scmp.ne.s32.totalorder %s97, %s113
      %p115 = scmp.eq.s32.totalorder %s21, 0
      %p116 = por %p114, %p115
      %s117 = ssub.s32 %s22, %s34
      %s118 = ssub.s32 %s23, %s30
      %s119 = sor.u32 %s117, %s118
      %p120 = scmp.eq.s32.totalorder %s119, 0
      %s122 = sadd.s32 %s121, 1
      %s123 = scalar_select %p120, %s121, %s122
      %p126 = pneg %p120
      %p127 = scmp.eq.s32.totalorder %s15, 1
      %p128 = por %p126, %p127
      %p129 = scmp.ne.s32.totalorder %s121, %s124
      %p130 = scmp.eq.s32.totalorder %s15, 0
      %p131 = por %p129, %p130
      %p132 = scmp.ne.s32.totalorder %s121, %s124
      %p133 = scmp.eq.s32.totalorder %s20, 1
      %p134 = por %p132, %p133
      %p135 = scmp.ne.s32.totalorder %s124, %s125
      %p136 = scmp.eq.s32.totalorder %s20, 0
      %p137 = por %p135, %p136
      %p138 = scmp.ne.s32.totalorder %s124, %s125
      %p139 = scmp.eq.s32.totalorder %s21, 1
      %p140 = por %p138, %p139
      %p142 = scmp.ne.s32.totalorder %s125, %s141
      %p143 = scmp.eq.s32.totalorder %s21, 0
      %p144 = por %p142, %p143
      %p145 = scmp.le.s32.totalorder 1, %s15
      %p146 = scmp.lt.s32.totalorder %s15, 3
      %p147 = pnand %p145, %p146
      %p148 = pneg %p147
      // Predicated region
      $region9: #{tpu_custom_call.1} parent=5 // pred_check
        _
      $region10: #{tpu_custom_call.1} parent=5 // pred_check_branch
        %150 = sbr.rel (%p147) target = $region12
      $region11: #{tpu_custom_call.1} parent=5 // pred_region
        %s151 = ssub.s32 %s15, 1
        // Predicated region
        $region13: #{tpu_custom_call.1} parent=11 // pred_check
          %p152 = pneg %p81
        $region14: #{tpu_custom_call.1} parent=11 // pred_check_branch
          %154 = sbr.rel (%p152) target = $region16
        $region15: #{tpu_custom_call.1} parent=11 // pred_region
          %p155 = scmp.lt.s32.totalorder %s25, 0
          %s156 = scalar_select %p155, %s25, 0
          %s157 = smul.addr %s156, 2
          %s158 = scalar_lea.vmem %s1, %s157
        $region16: #{tpu_custom_call.1} parent=11 // pred_fallthru
          _
      $region12: #{tpu_custom_call.1} parent=5 // pred_fallthru
        _
      %p159 = scmp.lt.s32.totalorder %s15, 2
      // Predicated region
      $region17: #{tpu_custom_call.1} parent=5 // pred_check
        %p160 = pneg %p159
      $region18: #{tpu_custom_call.1} parent=5 // pred_check_branch
        %162 = sbr.rel (%p160) target = $region20
      $region19: #{tpu_custom_call.1} parent=5 // pred_region
        // Predicated region
        $region21: #{tpu_custom_call.1} parent=19 // pred_check
          %p163 = pneg %p49
        $region22: #{tpu_custom_call.1} parent=19 // pred_check_branch
          %165 = sbr.rel (%p163) target = $region24
        $region23: #{tpu_custom_call.1} parent=19 // pred_region
          %s166 = sand.u32 %s39, 1
          %s167 = scalar_lea.sflag [#allocation3], %s166
          %s168 = sand.u32 %s39, 1
          %s169 = smul.addr %s168, 2
          %s170 = scalar_lea.vmem [#allocation2], %s169
          %s172 = ssub.s32 32, 32
          %173 = vsyncadd %s167, %s172
          %s174 = sadd.s32 %s23, %s22
          %s175 = smul.addr %s174, 32
          %s176 = scalar_lea.hbm %s0, %s175
          %s178 = sshll.u32 %s170, 4
          %s179 = int_to_ptr.vmem [resolvable:$true] %s178
          %181 = dma.hbm_to_vmem [thread:$0]  %s176, 32, %s179, %s167
        $region24: #{tpu_custom_call.1} parent=19 // pred_fallthru
          _
        // Predicated region
        $region25: #{tpu_custom_call.1} parent=19 // pred_check
          %p182 = pneg %p103
        $region26: #{tpu_custom_call.1} parent=19 // pred_check_branch
          %184 = sbr.rel (%p182) target = $region28
        $region27: #{tpu_custom_call.1} parent=19 // pred_region
          %p185 = scmp.lt.s32.totalorder %s22, 1
          %s186 = scalar_select %p185, %s22, 1
          %p187 = scmp.lt.s32.totalorder %s23, 0
          %s188 = scalar_select %p187, %s23, 0
          %s189 = sadd.s32 %s188, %s186
          %s190 = smul.addr %s189, 2
          %s191 = scalar_lea.vmem %s2, %s190
        $region28: #{tpu_custom_call.1} parent=19 // pred_fallthru
          _
      $region20: #{tpu_custom_call.1} parent=5 // pred_fallthru
        _
      %p192 = scmp.le.s32.totalorder 1, %s15
      %p193 = scmp.lt.s32.totalorder %s15, 3
      %p194 = pnand %p192, %p193
      %p195 = pneg %p194
      // Predicated region
      $region29: #{tpu_custom_call.1} parent=5 // pred_check
        _
      $region30: #{tpu_custom_call.1} parent=5 // pred_check_branch
        %197 = sbr.rel (%p194) target = $region32
      $region31: #{tpu_custom_call.1} parent=5 // pred_region
        %s198 = ssub.s32 %s15, 1
        %s199 = sand.u32 %s42, 1
        %s200 = scalar_lea.sflag [#allocation3], %s199
        %s201 = sand.u32 %s42, 1
        %s202 = smul.addr %s201, 2
        %s203 = scalar_lea.vmem [#allocation2], %s202
        // Predicated region
        $region33: #{tpu_custom_call.1} parent=31 // pred_check
          %p204 = pneg %p55
        $region34: #{tpu_custom_call.1} parent=31 // pred_check_branch
          %206 = sbr.rel (%p204) target = $region36
        $region35: #{tpu_custom_call.1} parent=31 // pred_region
          %207 = dma.done %s200, 32
        $region36: #{tpu_custom_call.1} parent=31 // pred_fallthru
          _
        %s208 = sand.u32 %s42, 1
        %s209 = scalar_lea.sflag [#allocation3], %s208
        %s210 = sand.u32 %s42, 1
        %s211 = smul.addr %s210, 2
        %s212 = scalar_lea.vmem [#allocation2], %s211
        %p213 = pneg %p55
        %p214 = pneg %p52
        %p215 = scmp.lt.s32.totalorder %s25, 0
        %s216 = scalar_select %p215, %s25, 0
        %s217 = smul.addr %s216, 2
        %s218 = scalar_lea.vmem %s1, %s217
        %p219 = pneg %p81
        %p220 = pneg %p78
        %p221 = scmp.lt.s32.totalorder %s24, 1
        %s222 = scalar_select %p221, %s24, 1
        %p223 = scmp.lt.s32.totalorder %s25, 0
        %s224 = scalar_select %p223, %s25, 0
        %s225 = sadd.s32 %s224, %s222
        %s226 = smul.addr %s225, 2
        %s227 = scalar_lea.vmem %s2, %s226
        %p228 = pneg %p109
        %p229 = pneg %p106
        %p230 = pneg %p137
        %p231 = pneg %p134
        %s232 = sand.u32 %s124, 1
        %s233 = scalar_lea.sflag [#allocation4], %s232
        %s234 = sand.u32 %s124, 1
        %s235 = smul.addr %s234, 2
        %s236 = scalar_lea.vmem [#allocation5], %s235
        %p237 = scmp.lt.s32.totalorder %s25, 0
        %s238 = scalar_select %p237, %s25, 0
        %s239 = smul.addr %s238, 2
        %s240 = scalar_lea.vmem %s1, %s239
        %p241 = scmp.lt.s32.totalorder %s24, 1
        %s242 = scalar_select %p241, %s24, 1
        %p243 = scmp.lt.s32.totalorder %s25, 0
        %s244 = scalar_select %p243, %s25, 0
        %s245 = sadd.s32 %s244, %s242
        %s246 = smul.addr %s245, 2
        %s247 = scalar_lea.vmem %s2, %s246
        %v248 = vld [vmem:[%s203] sm:$0x3]
        %v249 = vld [vmem:[%s240] sm:$0x3]
        %v250 = vadd.f32 %v248, %v249
        %v251 = vld [vmem:[%s247] sm:$0x3]
        %vm252 = vcmp.ge.u32.totalorder %v251, 429496730
        %v253 = vmul.f32 %v250, 1.1111112
        %v254 = vsel %vm252, %v253, 0.0
        %255 = vst [vmem:[%s236] sm:$0x3] %v254
        %s256 = sand.u32 %s124, 1
        %s257 = scalar_lea.sflag [#allocation4], %s256
        %s258 = sand.u32 %s124, 1
        %s259 = smul.addr %s258, 2
        %s260 = scalar_lea.vmem [#allocation5], %s259
        // Predicated region
        $region37: #{tpu_custom_call.1} parent=31 // pred_check
          %p261 = pneg %p134
        $region38: #{tpu_custom_call.1} parent=31 // pred_check_branch
          %263 = sbr.rel (%p261) target = $region40
        $region39: #{tpu_custom_call.1} parent=31 // pred_region
          %s265 = ssub.s32 32, 32
          %266 = vsyncadd %s257, %s265
          %s267 = sadd.s32 %s25, %s24
          %s268 = smul.addr %s267, 32
          %s269 = scalar_lea.hbm %s3, %s268
          %s271 = sshll.u32 %s260, 4
          %s272 = int_to_ptr.vmem [resolvable:$true] %s271
          %274 = dma.vmem_to_hbm [thread:$0]  %s272, 32, %s269, %s257
        $region40: #{tpu_custom_call.1} parent=31 // pred_fallthru
          _
      $region32: #{tpu_custom_call.1} parent=5 // pred_fallthru
        _
      %p275 = scmp.le.s32.totalorder 2, %s15
      // Predicated region
      $region41: #{tpu_custom_call.1} parent=5 // pred_check
        %p276 = pneg %p275
      $region42: #{tpu_custom_call.1} parent=5 // pred_check_branch
        %278 = sbr.rel (%p276) target = $region44
      $region43: #{tpu_custom_call.1} parent=5 // pred_region
        %s279 = ssub.s32 %s15, 2
        // Predicated region
        $region45: #{tpu_custom_call.1} parent=43 // pred_check
          %p280 = pneg %p140
        $region46: #{tpu_custom_call.1} parent=43 // pred_check_branch
          %282 = sbr.rel (%p280) target = $region48
        $region47: #{tpu_custom_call.1} parent=43 // pred_region
          %s283 = sand.u32 %s125, 1
          %s284 = scalar_lea.sflag [#allocation4], %s283
          %s285 = sand.u32 %s125, 1
          %s286 = smul.addr %s285, 2
          %s287 = scalar_lea.vmem [#allocation5], %s286
          %288 = dma.done %s284, 32
        $region48: #{tpu_custom_call.1} parent=43 // pred_fallthru
          _
      $region44: #{tpu_custom_call.1} parent=5 // pred_fallthru
        _
    $region6: #{tpu_custom_call.1} parent=1 // loop_footer
      %s19 = sadd.s32 1, %s15
    $region7: #{tpu_custom_call.1} parent=1 // loop_footer_branch
      %14 = sbr.rel target = $region3
    $region8: #{tpu_custom_call.1} parent=1 // loop_exit
      _
    %289 = vsyncpa [#allocation3], 1
    %s290 = scalar_lea.sflag [#allocation3], 1
    %291 = vsyncpa %s290, 1
    %292 = vsyncpa [#allocation4], 1
    %s293 = scalar_lea.sflag [#allocation4], 1
    %294 = vsyncpa %s293, 1

</llo_original>
